<compile_context>
chip_gen: v5e
topology: v5e:2x2
jax: 0.10.0
libtpu: 0.0.40
codegen_flags: <defaults>
</compile_context>

<pallas_src>
import jax
import jax.numpy as jnp
from jax.experimental import pallas as pl
from jax.experimental.pallas import tpu as pltpu


def _choose_tn(hidden):
    """Lane-dense output-column tile (multiple of 128 lanes when possible)."""
    if hidden % 128 == 0:
        for c in (1024, 512, 256, 128):
            if hidden % c == 0:
                return c
    # TODO(synk): for large hidden not 128-aligned this keeps the whole (H, H)
    # weight slab in VMEM (masked lane stores); a padded-tn / masked-N path
    # would be needed for that case.
    return hidden


def _resblock_kernel(xb_ref, xr_ref, wt_ref, b_ref, o_ref):
    """Fused linear + SiLU + residual for one (tm, tn) output tile.

    xb_ref: (tm, H)   bf16 matmul operand (full width, reused across N blocks)
    xr_ref: (tm, tn)  residual tile in the original dtype
    wt_ref: (H, tn)   pre-transposed, pre-tiled weight slab (bf16)
    b_ref : (1, tn)   bias slab (f32)
    """
    # linear: y = x @ W^T + b, accumulate in f32 on the MXU
    y = jnp.dot(xb_ref[...], wt_ref[...], preferred_element_type=jnp.float32)
    y = y + b_ref[...].astype(jnp.float32)          # (1, tn) broadcast

    # SiLU(y) = y * sigmoid(y)  (exp on the EUP), all in f32
    act = y * jax.nn.sigmoid(y)

    # residual add in f32 on the original-precision tile
    o_ref[...] = (xr_ref[...].astype(jnp.float32) + act).astype(o_ref.dtype)


def prepare_resblock_params(weight, bias, *, param_dtype=jnp.bfloat16):
    """One-time (outside jit) param prep.

    * transpose PyTorch (out, in) weight to (in, out)
    * cast to the matmul dtype (bf16)
    * pre-tile into contiguous (num_n, H, tn) column slabs so each weight
      fetch is one large linear DMA.
    """
    w = jnp.asarray(weight)
    h_out, h_in = w.shape
    tn = _choose_tn(h_out)
    num_n = h_out // tn
    wt = w.T.astype(param_dtype)                                  # (H_in, H_out)
    wt_slabs = wt.reshape(h_in, num_n, tn).transpose(1, 0, 2)     # (num_n, H_in, tn)
    b2d = jnp.asarray(bias, dtype=jnp.float32).reshape(1, h_out)
    return wt_slabs, b2d


@jax.jit
def resblock_pallas(x, wt_slabs, b2d):
    """out = x + SiLU(x @ W^T + b) for x of shape (..., hidden)."""
    hidden = x.shape[-1]
    num_n, _, tn = wt_slabs.shape
    lead_shape = x.shape[:-1]
    x2d = x.reshape(-1, hidden)                                   # (M, H)
    m = x2d.shape[0]

    # ---- row (M) tile: minimise padding among MXU-filling sizes; decode-size
    #      M rounds up to a multiple of 16 (bf16 sublane packing).
    if m >= 128:
        tm = min((256, 128), key=lambda c: (-(-m // c) * c, -c))
    else:
        tm = max(16, ((m + 15) // 16) * 16)
    m_pad = -(-m // tm) * tm
    if m_pad != m:
        x2d = jnp.pad(x2d, ((0, m_pad - m), (0, 0)))
    num_m = m_pad // tm

    # bf16 matmul operand: cast once here, re-streamed per N block at half width
    x_mm = x2d.astype(wt_slabs.dtype)

    # ---- scoped-VMEM budget from the tiles (double-buffered) + f32 temps
    xb_b = jnp.dtype(x_mm.dtype).itemsize
    xr_b = jnp.dtype(x2d.dtype).itemsize
    w_b = jnp.dtype(wt_slabs.dtype).itemsize
    o_b = jnp.dtype(x.dtype).itemsize
    vmem_need = (2 * tm * hidden * xb_b        # bf16 x row tile
                 + 2 * tm * tn * xr_b          # residual tile
                 + 2 * hidden * tn * w_b       # weight slab
                 + 2 * tn * 4                  # bias slab
                 + 2 * tm * tn * o_b           # output tile
                 + 2 * tm * tn * 4)            # f32 y / act intermediates
    try:
        phys_vmem = int(pltpu.get_tpu_info().vmem_capacity_bytes)
    except Exception:  # conservative: smallest per-core VMEM across v5e/v6e/v7x
        phys_vmem = 64 << 20
    vmem_limit = min(max(16 << 20, int(vmem_need * 1.5) + (2 << 20)),
                     int(0.8 * phys_vmem))

    out2d = pl.pallas_call(
        _resblock_kernel,
        out_shape=jax.ShapeDtypeStruct((m_pad, hidden), x.dtype),
        grid_spec=pltpu.PrefetchScalarGridSpec(
            num_scalar_prefetch=0,
            grid=(num_n, num_m),               # N outer -> each weight slab DMA'd once
            in_specs=[
                pl.BlockSpec((tm, hidden), lambda j, i: (i, 0)),          # bf16 x row tile
                pl.BlockSpec((tm, tn), lambda j, i: (i, j)),              # residual tile
                pl.BlockSpec((pl.Squeezed(), hidden, tn),
                             lambda j, i: (j, 0, 0)),                     # weight slab
                pl.BlockSpec((1, tn), lambda j, i: (0, j)),               # bias slab
            ],
            out_specs=pl.BlockSpec((tm, tn), lambda j, i: (i, j)),
        ),
        compiler_params=pltpu.CompilerParams(
            # N parallel / M arbitrary: the v7x megacore split shards the N
            # axis, keeping one total HBM pass over the weight per chip.
            dimension_semantics=("parallel", "arbitrary"),
            vmem_limit_bytes=vmem_limit,
        ),
    )(x_mm, x2d, wt_slabs, b2d)

    if m_pad != m:
        out2d = out2d[:m]
    return out2d.reshape(*lead_shape, hidden)


if __name__ == "__main__":
    # Small shapes implied by the module: (batch, seq, hidden)
    batch, seq, hidden = 2, 8, 32

    key = jax.random.PRNGKey(0)
    kx, kb, kw = jax.random.split(key, 3)

    x = jax.random.normal(kx, (batch, seq, hidden), dtype=jnp.float32)

    # --- Test 1: the module's actual init (zero weight, PyTorch default bias)
    weight = jnp.zeros((hidden, hidden), dtype=jnp.float32)
    bound = 1.0 / float(hidden) ** 0.5
    bias = jax.random.uniform(kb, (hidden,), dtype=jnp.float32,
                              minval=-bound, maxval=bound)

    wt_slabs, b2d = prepare_resblock_params(weight, bias)
    out = jax.block_until_ready(resblock_pallas(x, wt_slabs, b2d))

    y_ref = x @ weight.T + bias
    ref = x + y_ref * jax.nn.sigmoid(y_ref)
    assert jnp.allclose(out, ref, atol=1e-5, rtol=1e-5), "zero-weight mismatch"

    # --- Test 2: non-zero weight exercising the bf16 matmul path.  Tight check
    #     against a bf16-faithful reference; loose check against the pure-f32
    #     PyTorch math (explicit bf16-weight tolerance, per the review).
    weight2 = 0.05 * jax.random.normal(kw, (hidden, hidden), dtype=jnp.float32)
    wt_slabs2, b2d2 = prepare_resblock_params(weight2, bias)
    out2 = jax.block_until_ready(resblock_pallas(x, wt_slabs2, b2d2))

    xb = x.astype(jnp.bfloat16).astype(jnp.float32)
    wb = weight2.astype(jnp.bfloat16).astype(jnp.float32)
    y_bf = xb @ wb.T + bias
    ref_bf = x + y_bf * jax.nn.sigmoid(y_bf)
    assert jnp.allclose(out2, ref_bf, atol=1e-4, rtol=1e-4), "bf16-faithful mismatch"

    y_f32 = x @ weight2.T + bias
    ref_f32 = x + y_f32 * jax.nn.sigmoid(y_f32)
    assert jnp.allclose(out2, ref_f32, atol=2e-2, rtol=2e-2), "f32-tolerance mismatch"

    print("KERNEL_OK")
</pallas_src>

<mosaic_0001>
module attributes {stable_mosaic.version = 11 : i64} {
  func.func @_resblock_kernel(%arg0: i32, %arg1: i32, %arg2: memref<16x32xbf16, #tpu.memory_space<vmem>>, %arg3: memref<16x32xf32, #tpu.memory_space<vmem>>, %arg4: memref<1x32x32xbf16, #tpu.memory_space<vmem>>, %arg5: memref<1x32xf32, #tpu.memory_space<vmem>>, %arg6: memref<16x32xf32, #tpu.memory_space<vmem>>) attributes {dimension_semantics = [#tpu.dimension_semantics<parallel>, #tpu.dimension_semantics<arbitrary>], iteration_bounds = array<i64: 1, 1>, scalar_prefetch = 0 : i64, scratch_operands = 0 : i64, tpu.core_type = #tpu.core_type<tc>, window_params = [{transform_indices = @transform_0, window_bounds = array<i64: 16, 32>}, {transform_indices = @transform_1, window_bounds = array<i64: 16, 32>}, {transform_indices = @transform_2, window_bounds = array<i64: 1, 32, 32>}, {transform_indices = @transform_3, window_bounds = array<i64: 1, 32>}, {transform_indices = @transform_4, window_bounds = array<i64: 16, 32>}]} {
    %c0 = arith.constant 0 : index
    %c0_0 = arith.constant 0 : index
    %0 = vector.load %arg2[%c0, %c0_0] : memref<16x32xbf16, #tpu.memory_space<vmem>>, vector<16x32xbf16>
    %c0_1 = arith.constant 0 : index
    %c0_2 = arith.constant 0 : index
    %c0_3 = arith.constant 0 : index
    %1 = vector.load %arg4[%c0_1, %c0_2, %c0_3] : memref<1x32x32xbf16, #tpu.memory_space<vmem>>, vector<1x32x32xbf16>
    %2 = vector.shape_cast %1 : vector<1x32x32xbf16> to vector<32x32xbf16>
    %cst = arith.constant dense<0.000000e+00> : vector<16x32xf32>
    %3 = tpu.matmul %0, %2, %cst {dimension_numbers = #tpu.dot_dimension_numbers<[1], [0], [0], [1], [0, 0, 1, 1], [], []>} : vector<16x32xbf16>, vector<32x32xbf16>, vector<16x32xf32> -> vector<16x32xf32>
    %c0_4 = arith.constant 0 : index
    %c0_5 = arith.constant 0 : index
    %4 = vector.load %arg5[%c0_4, %c0_5] : memref<1x32xf32, #tpu.memory_space<vmem>>, vector<1x32xf32>
    %5 = vector.broadcast %4 : vector<1x32xf32> to vector<16x32xf32>
    %6 = arith.addf %3, %5 : vector<16x32xf32>
    %7 = arith.negf %6 : vector<16x32xf32>
    %8 = math.exp %7 : vector<16x32xf32>
    %cst_6 = arith.constant 1.000000e+00 : f32
    %9 = vector.broadcast %cst_6 : f32 to vector<16x32xf32>
    %10 = arith.addf %9, %8 : vector<16x32xf32>
    %11 = arith.divf %9, %10 : vector<16x32xf32>
    %12 = arith.mulf %6, %11 : vector<16x32xf32>
    %c0_7 = arith.constant 0 : index
    %c0_8 = arith.constant 0 : index
    %13 = vector.load %arg3[%c0_7, %c0_8] : memref<16x32xf32, #tpu.memory_space<vmem>>, vector<16x32xf32>
    %14 = arith.addf %13, %12 : vector<16x32xf32>
    %c0_9 = arith.constant 0 : index
    %c0_10 = arith.constant 0 : index
    %15 = vector.load %arg6[%c0_9, %c0_10] : memref<16x32xf32, #tpu.memory_space<vmem>>, vector<16x32xf32>
    tpu.vector_store %arg6[%c0_9, %c0_10], %14 {strides = array<i32>} : memref<16x32xf32, #tpu.memory_space<vmem>>, vector<16x32xf32>,
    return
  }
  func.func @transform_0(%arg0: i32, %arg1: i32) -> (i32, i32) {
    %c0_i32 = arith.constant 0 : i32
    %c0_i32_0 = arith.constant 0 : i32
    return %arg1, %c0_i32 : i32, i32
  }
  func.func @transform_1(%arg0: i32, %arg1: i32) -> (i32, i32) {
    %c0_i32 = arith.constant 0 : i32
    return %arg1, %arg0 : i32, i32
  }
  func.func @transform_2(%arg0: i32, %arg1: i32) -> (i32, i32, i32) {
    %c0_i32 = arith.constant 0 : i32
    %c0_i32_0 = arith.constant 0 : i32
    %c0_i32_1 = arith.constant 0 : i32
    return %arg0, %c0_i32, %c0_i32_0 : i32, i32, i32
  }
  func.func @transform_3(%arg0: i32, %arg1: i32) -> (i32, i32) {
    %c0_i32 = arith.constant 0 : i32
    %c0_i32_0 = arith.constant 0 : i32
    return %c0_i32, %arg0 : i32, i32
  }
  func.func @transform_4(%arg0: i32, %arg1: i32) -> (i32, i32) {
    %c0_i32 = arith.constant 0 : i32
    return %arg1, %arg0 : i32, i32
  }
}

</mosaic_0001>

<llo_original>
// kernel: resblock_pallas.1
$region0: #{resblock_pallas.1}
  #allocation0 [shape = 'u32[]', space=smem, size = 0x4, offset = 0x4, fixed_abs, tag = 'smem constant byte address 0x4 - core index']
  #allocation1 [shape = 'u32[72,128]{1,0:T(1,128)}', space=vmem, size = 0x9000, scoped, tag = 'internal scratch']
  %s0 = inlined_call_operand.vmem [shape: bf16[16,32], index: 0, kind: input, shape index: {}]
  %s1 = inlined_call_operand.vmem [shape: f32[16,32], index: 1, kind: input, shape index: {}]
  %s2 = inlined_call_operand.hbm [shape: bf16[1,32,32], index: 2, kind: input, shape index: {}]
  %s3 = inlined_call_operand.vmem [shape: f32[1,32], index: 3, kind: input, shape index: {}]
  %s4 = inlined_call_operand.hbm [shape: f32[16,32], index: 4, kind: output, shape index: {}]
  %s5 = sld [smem:[#allocation0]]
  $region30: #{resblock_pallas.1} parent=0
    _
  %s7 = ssub.s32 1, %s5
  %s8 = scalar_select 0, %s7, %s5
  $region1: #{resblock_pallas.1} parent=0
    #allocation2 [shape = 'u8[8192]{0}', space=vmem, size = 0x2000, scoped, tag = 'input window, operand 2, single buffered']
    #allocation3 [shape = 's32[1]{0}', space=sflag, size = 0x4, scoped, tag = 'scoped memory for resblock_pallas.1']
    #allocation4 [shape = 's32[1]{0}', space=sflag, size = 0x4, scoped, tag = 'scoped memory for resblock_pallas.1']
    #allocation5 [shape = 'u8[8192]{0}', space=vmem, size = 0x2000, scoped, tag = 'output window, operand 0, single buffered']
    %9 = vsyncpa [#allocation3], 0
    %10 = vsyncpa [#allocation4], 0
    // Predicated region
    $region2: #{resblock_pallas.1} parent=1 // pred_check
      _
    $region3: #{resblock_pallas.1} parent=1 // pred_check_branch
      %12 = sbr.rel (0) target = $region5
    $region4: #{resblock_pallas.1} parent=1 // pred_region
      _
    $region5: #{resblock_pallas.1} parent=1 // pred_fallthru
      _
    // Predicated region
    $region6: #{resblock_pallas.1} parent=1 // pred_check
      _
    $region7: #{resblock_pallas.1} parent=1 // pred_check_branch
      %14 = sbr.rel (0) target = $region9
    $region8: #{resblock_pallas.1} parent=1 // pred_region
      _
    $region9: #{resblock_pallas.1} parent=1 // pred_fallthru
      _
    // Predicated region
    $region10: #{resblock_pallas.1} parent=1 // pred_check
      _
    $region11: #{resblock_pallas.1} parent=1 // pred_check_branch
      %16 = sbr.rel (0) target = $region13
    $region12: #{resblock_pallas.1} parent=1 // pred_region
      %18 = vsyncadd [#allocation3], 0
      %s19 = sshll.u32 %s2, 4
      %s20 = int_to_ptr.hbm [resolvable:$true] %s19
      %s21 = sshll.u32 [#allocation2], 4
      %s22 = int_to_ptr.vmem [resolvable:$true] %s21
      %27 = dma.hbm_to_vmem [thread:$0]  %s20, 256, %s22, [#allocation3], 64, 64, 4
    $region13: #{resblock_pallas.1} parent=1 // pred_fallthru
      _
    // Predicated region
    $region14: #{resblock_pallas.1} parent=1 // pred_check
      _
    $region15: #{resblock_pallas.1} parent=1 // pred_check_branch
      %29 = sbr.rel (0) target = $region17
    $region16: #{resblock_pallas.1} parent=1 // pred_region
      _
    $region17: #{resblock_pallas.1} parent=1 // pred_fallthru
      _
    // Predicated region
    $region18: #{resblock_pallas.1} parent=1 // pred_check
      _
    $region19: #{resblock_pallas.1} parent=1 // pred_check_branch
      %31 = sbr.rel (0) target = $region21
    $region20: #{resblock_pallas.1} parent=1 // pred_region
      %33 = dma.done [#allocation3], 256
    $region21: #{resblock_pallas.1} parent=1 // pred_fallthru
      _
    %v35 = vld [vmem:[%s0] sm:$0xf]
    %v36 = vld [vmem:[%s0 + $0x4] sm:$0xf]
    %v37 = vld [vmem:[#allocation2] sm:$0xf]
    %v38 = vld [vmem:[#allocation2 + $0x4] sm:$0xf]
    %v39 = vld [vmem:[#allocation2 + $0x8] sm:$0xf]
    %v40 = vld [vmem:[#allocation2 + $0xc] sm:$0xf]
    %v41 = vld [vmem:[%s3] sm:$0x1]
    %v43 = vperm.slane %v41, 0
    %v47 = vunpack.c.l.b16 %v35
    %v48 = vunpack.c.l.b16 %v36
    %v49 = vpack.c.b16 %v48, %v47
    %v54 = vunpack.c.l.b16 %v37
    %v55 = vunpack.c.l.b16 %v38
    %v56 = vunpack.c.l.b16 %v39
    %v57 = vunpack.c.l.b16 %v40
    %v58 = vpack.c.b16 %v55, %v54
    %v59 = vpack.c.b16 %v57, %v56
    %vm62 = vcmask 261120
    %v64 = vsel %vm62, %v49, 0
    %66 = vmatpush.bf16.msra.mxu0 0
    %67 = vmatpush.bf16.msra.mxu0 0
    %68 = vmatpush.bf16.msra.mxu0 0
    %69 = vmatpush.bf16.msra.mxu0 0
    %70 = vmatpush.bf16.msra.mxu0 0
    %71 = vmatpush.bf16.msra.mxu0 0
    %72 = vmatpush.bf16.msra.mxu0 %v59
    %73 = vmatpush.bf16.msra.mxu0 %v58
    %74 = vmatmul.bf16.gmra.mxu0 %v64
    %v75 = vpop.f32.mrf.mxu0
    %v76 = vadd.f32 %v43, %v75
    %v77 = vpop.f32.mrf.mxu0
    %v78 = vadd.f32 %v43, %v77
    %79 = vdwg.mxu0
    %v80 = vxor.u32 %v76, 2147483648
    %v81 = vxor.u32 %v78, 2147483648
    %v82 = vmul.f32 %v80, 1.442695
    %v83 = vpow.pop %v82
    %v84 = vmul.f32 %v81, 1.442695
    %v85 = vpow.pop %v84
    %v86 = vadd.f32 %v83, 1.0
    %v87 = vadd.f32 %v85, 1.0
    %v88 = vrcp.pop %v86
    %v89 = vmul.f32 %v86, %v88
    %v90 = vsub.f32 1.0, %v89
    %v91 = vmul.f32 %v88, %v90
    %v92 = vadd.f32 %v88, %v91
    %vm93 = vweird.f32 %v86
    %vm94 = vweird.f32 %v88
    %vm95 = vmor %vm93, %vm94
    %v96 = vsel %vm95, %v88, %v92
    %v97 = vand.u32 2147483647, %v86
    %vm98 = vcmp.eq.f32.partialorder %v97, 8.507059e+37
    %v99 = vand.u32 %v86, 2147483648
    %v100 = vor.u32 1.1754944e-38, %v99
    %v101 = vsel %vm98, %v100, %v96
    %v102 = vmul.f32 1.0, %v101
    %v103 = vrcp.pop %v87
    %v104 = vmul.f32 %v87, %v103
    %v105 = vsub.f32 1.0, %v104
    %v106 = vmul.f32 %v103, %v105
    %v107 = vadd.f32 %v103, %v106
    %vm108 = vweird.f32 %v87
    %vm109 = vweird.f32 %v103
    %vm110 = vmor %vm108, %vm109
    %v111 = vsel %vm110, %v103, %v107
    %v112 = vand.u32 2147483647, %v87
    %vm113 = vcmp.eq.f32.partialorder %v112, 8.507059e+37
    %v114 = vand.u32 %v87, 2147483648
    %v115 = vor.u32 1.1754944e-38, %v114
    %v116 = vsel %vm113, %v115, %v111
    %v117 = vmul.f32 1.0, %v116
    %v118 = vmul.f32 %v76, %v102
    %v119 = vmul.f32 %v78, %v117
    %v120 = vld [vmem:[%s1] sm:$0xff]
    %v121 = vld [vmem:[%s1 + $0x8] sm:$0xff]
    %v122 = vadd.f32 %v120, %v118
    %v123 = vadd.f32 %v121, %v119
    %124 = vst.msk [vmem:[#allocation5] sm:$0xff] %vm62, %v122
    %125 = vst.msk [vmem:[#allocation5 + $0x8] sm:$0xff] %vm62, %v123
    // Predicated region
    $region22: #{resblock_pallas.1} parent=1 // pred_check
      _
    $region23: #{resblock_pallas.1} parent=1 // pred_check_branch
      %127 = sbr.rel (0) target = $region25
    $region24: #{resblock_pallas.1} parent=1 // pred_region
      %129 = vsyncadd [#allocation4], 0
      %s130 = sshll.u32 [#allocation5], 4
      %s131 = int_to_ptr.vmem [resolvable:$true] %s130
      %s132 = sshll.u32 %s4, 4
      %s133 = int_to_ptr.hbm [resolvable:$true] %s132
      %138 = dma.vmem_to_hbm [thread:$0]  %s131, 256, %s133, [#allocation4], 128, 128, 8
    $region25: #{resblock_pallas.1} parent=1 // pred_fallthru
      _
    // Predicated region
    $region26: #{resblock_pallas.1} parent=1 // pred_check
      _
    $region27: #{resblock_pallas.1} parent=1 // pred_check_branch
      %140 = sbr.rel (0) target = $region29
    $region28: #{resblock_pallas.1} parent=1 // pred_region
      %142 = dma.done [#allocation4], 256
    $region29: #{resblock_pallas.1} parent=1 // pred_fallthru
      _
    %143 = vsyncpa [#allocation3], 1
    %144 = vsyncpa [#allocation4], 1

</llo_original>
